<compile_context>
chip_gen: v7x
topology: tpu7x:2x2x1
jax: 0.10.0
libtpu: 0.0.40
codegen_flags: <defaults>
</compile_context>

<pallas_src>
import functools
import math

import jax
import jax.numpy as jnp
from jax.experimental import pallas as pl
from jax.experimental.pallas import tpu as pltpu


def _cdiv(a, b):
    return (a + b - 1) // b


def _round_up(x, m):
    return _cdiv(x, m) * m


def _pick_packing(N, D):
    """Rows packed per 128*w-lane output row; prefer wide, pad-free packing."""
    if D >= 128 or (128 % D) != 0:
        return 1                      # already lane-dense (or odd D; P=1 path)
    base = 128 // D
    for widen in (4, 2, 1):           # try 512 -> 256 -> 128 output lanes
        P = base * widen
        if N % P == 0:
            return P                  # no row padding, no post-kernel slice
    return base                       # rare: pad < base rows, slice afterwards


def _hsqc_embed_kernel(x_ref, w_ref, b_ref, o_ref):
    # x_ref: (tm, C)  packed input rows, C = P*K lanes (original dtype)
    # w_ref: (C, L)   block-diagonal replicated weight, L = P*D lanes, f32
    # b_ref: (1, L)   tiled bias, f32
    # o_ref: (tm, L)  packed, lane-dense output rows
    x = x_ref[...].astype(jnp.float32)
    acc = jnp.dot(x, w_ref[...], preferred_element_type=jnp.float32)  # MXU
    y = acc + b_ref[...]                                              # VPU
    o_ref[...] = jnp.maximum(y, 0.0).astype(o_ref.dtype)


@functools.partial(jax.jit, static_argnames=("block_rows", "out_dtype"))
def spectrum_embedding_hsqc(padded_spectra, weight, bias, block_rows=32768,
                            out_dtype=None):
    """relu(padded_spectra @ weight.T + bias) via a Pallas TPU kernel.

    padded_spectra: (..., input_dim)
    weight:         (output_dim, input_dim)   (torch nn.Linear layout)
    bias:           (output_dim,)
    returns:        (..., output_dim)
    """
    *lead, K = padded_spectra.shape
    D = weight.shape[0]
    N = int(math.prod(lead)) if lead else 1
    if out_dtype is None:
        out_dtype = padded_spectra.dtype   # pass jnp.bfloat16 to halve HBM writes

    # Lane packing: P logical rows per packed row -> L = P*D output lanes.
    P = _pick_packing(N, D)
    C = P * K
    L = P * D
    N_pad = _round_up(N, P)                # == N on the preferred path
    M = N_pad // P                         # packed rows

    # Pure-layout input prep (contiguous reshapes; pad only when N % P != 0).
    x_flat = padded_spectra.reshape(N, K)
    if N_pad != N:
        x_flat = jnp.pad(x_flat, ((0, N_pad - N), (0, 0)))
    x_packed = x_flat.reshape(M, C)

    # Tiny block-diagonal replicated weight (C, L) and tiled bias (1, L).
    w_t = weight.astype(jnp.float32).T     # (K, D)
    if P == 1:
        w_blk = w_t
        b_row = bias.astype(jnp.float32).reshape(1, D)
    else:
        eye = jnp.eye(P, dtype=jnp.float32)
        w_blk = jnp.einsum("pq,kd->pkqd", eye, w_t).reshape(C, L)
        b_row = jnp.tile(bias.astype(jnp.float32).reshape(1, D), (1, P))

    # Row tiling (packed rows).  Keep >= 2 grid steps when possible (megacore);
    # Pallas masks the ragged last block, so tm need not divide M.
    desired = _round_up(max(block_rows // P, 8), 8)
    half = _round_up(_cdiv(M, 2), 8)
    tm = min(desired, half)
    if tm >= M:
        tm = M                              # single full-extent block
    grid = (_cdiv(M, tm),)

    out = pl.pallas_call(
        _hsqc_embed_kernel,
        out_shape=jax.ShapeDtypeStruct((M, L), out_dtype),
        grid_spec=pltpu.PrefetchScalarGridSpec(
            num_scalar_prefetch=0,
            grid=grid,
            in_specs=[
                pl.BlockSpec((tm, C), lambda i: (i, 0)),
                pl.BlockSpec((C, L), lambda i: (0, 0)),
                pl.BlockSpec((1, L), lambda i: (0, 0)),
            ],
            out_specs=pl.BlockSpec((tm, L), lambda i: (i, 0)),
        ),
        compiler_params=pltpu.CompilerParams(
            dimension_semantics=("parallel",),   # shards grid across TCs on v7x
        ),
    )(x_packed, w_blk, b_row)

    # (M, P*D) row-major is byte-identical to (N_pad, D) row-major.
    if N_pad == N:
        return out.reshape(*lead, D)        # free contiguous reshape
    # TODO(synk): this slice copies N*D elements; only hit when N is not a
    # multiple of 128//D (rare for batched spectra).
    return out.reshape(N_pad, D)[:N].reshape(*lead, D)


if __name__ == "__main__":
    # Small shapes consistent with the module: HSQC points are (1H, 13C) shift
    # pairs -> input_dim=2; embedding width output_dim=32.
    B, S = 2, 16
    input_dim, output_dim = 2, 32

    key = jax.random.PRNGKey(0)
    k_x, k_w, k_b = jax.random.split(key, 3)

    padded_spectra = jax.random.normal(k_x, (B, S, input_dim), dtype=jnp.float32)

    # Deterministic nn.Linear(input_dim, output_dim)-style params.
    bound = 1.0 / math.sqrt(input_dim)
    weight = jax.random.uniform(k_w, (output_dim, input_dim), jnp.float32,
                                -bound, bound)
    bias = jax.random.uniform(k_b, (output_dim,), jnp.float32, -bound, bound)

    out = spectrum_embedding_hsqc(padded_spectra, weight, bias)
    out = jax.block_until_ready(out)

    # Reference: same math as torch Linear + relu (f32).
    ref = jnp.maximum(
        jnp.einsum("bsk,dk->bsd", padded_spectra, weight) + bias, 0.0)
    assert out.shape == (B, S, output_dim)
    assert jnp.allclose(out, ref, atol=1e-4, rtol=1e-4), "mismatch vs reference"

    print("KERNEL_OK")
</pallas_src>

<mosaic_0001>
module attributes {stable_mosaic.version = 11 : i64} {
  func.func @_hsqc_embed_kernel(%arg0: i32, %arg1: memref<2x32xf32, #tpu.memory_space<vmem>>, %arg2: memref<32x512xf32, #tpu.memory_space<vmem>>, %arg3: memref<1x512xf32, #tpu.memory_space<vmem>>, %arg4: memref<2x512xf32, #tpu.memory_space<vmem>>) attributes {dimension_semantics = [#tpu.dimension_semantics<parallel>], iteration_bounds = array<i64: 1>, scalar_prefetch = 0 : i64, scratch_operands = 0 : i64, tpu.core_type = #tpu.core_type<tc>, window_params = [{transform_indices = @transform_0, window_bounds = array<i64: 2, 32>}, {pipeline_mode = #tpu.pipeline_mode<synchronous>, transform_indices = @transform_1, window_bounds = array<i64: 32, 512>}, {pipeline_mode = #tpu.pipeline_mode<synchronous>, transform_indices = @transform_2, window_bounds = array<i64: 1, 512>}, {transform_indices = @transform_3, window_bounds = array<i64: 2, 512>}]} {
    %c0 = arith.constant 0 : index
    %c0_0 = arith.constant 0 : index
    %0 = vector.load %arg1[%c0, %c0_0] : memref<2x32xf32, #tpu.memory_space<vmem>>, vector<2x32xf32>
    %c0_1 = arith.constant 0 : index
    %c0_2 = arith.constant 0 : index
    %1 = vector.load %arg2[%c0_1, %c0_2] : memref<32x512xf32, #tpu.memory_space<vmem>>, vector<32x512xf32>
    %cst = arith.constant dense<0.000000e+00> : vector<2x512xf32>
    %2 = tpu.matmul %0, %1, %cst {dimension_numbers = #tpu.dot_dimension_numbers<[1], [0], [0], [1], [0, 0, 1, 1], [], []>} : vector<2x32xf32>, vector<32x512xf32>, vector<2x512xf32> -> vector<2x512xf32>
    %c0_3 = arith.constant 0 : index
    %c0_4 = arith.constant 0 : index
    %3 = vector.load %arg3[%c0_3, %c0_4] : memref<1x512xf32, #tpu.memory_space<vmem>>, vector<1x512xf32>
    %4 = vector.broadcast %3 : vector<1x512xf32> to vector<2x512xf32>
    %5 = arith.addf %2, %4 : vector<2x512xf32>
    %cst_5 = arith.constant 0.000000e+00 : f32
    %6 = vector.broadcast %cst_5 : f32 to vector<2x512xf32>
    %7 = arith.maximumf %5, %6 : vector<2x512xf32>
    %c0_6 = arith.constant 0 : index
    %c0_7 = arith.constant 0 : index
    %8 = vector.load %arg4[%c0_6, %c0_7] : memref<2x512xf32, #tpu.memory_space<vmem>>, vector<2x512xf32>
    tpu.vector_store %arg4[%c0_6, %c0_7], %7 {strides = array<i32>} : memref<2x512xf32, #tpu.memory_space<vmem>>, vector<2x512xf32>,
    return
  }
  func.func @transform_0(%arg0: i32) -> (i32, i32) {
    %c0_i32 = arith.constant 0 : i32
    %c0_i32_0 = arith.constant 0 : i32
    return %arg0, %c0_i32 : i32, i32
  }
  func.func @transform_1(%arg0: i32) -> (i32, i32) {
    %c0_i32 = arith.constant 0 : i32
    %c0_i32_0 = arith.constant 0 : i32
    %c0_i32_1 = arith.constant 0 : i32
    return %c0_i32, %c0_i32_0 : i32, i32
  }
  func.func @transform_2(%arg0: i32) -> (i32, i32) {
    %c0_i32 = arith.constant 0 : i32
    %c0_i32_0 = arith.constant 0 : i32
    %c0_i32_1 = arith.constant 0 : i32
    return %c0_i32, %c0_i32_0 : i32, i32
  }
  func.func @transform_3(%arg0: i32) -> (i32, i32) {
    %c0_i32 = arith.constant 0 : i32
    %c0_i32_0 = arith.constant 0 : i32
    return %arg0, %c0_i32 : i32, i32
  }
}

</mosaic_0001>

<llo_original>
// kernel: spectrum_embedding_hsqc.1
$region0: #{spectrum_embedding_hsqc.1}
  #allocation0 [shape = 'u32[]', space=smem, size = 0x4, offset = 0x4, fixed_abs, tag = 'smem constant byte address 0x4 - core index']
  #allocation1 [shape = 'u32[144,128]{1,0:T(1,128)}', space=vmem, size = 0x12000, scoped, tag = 'internal scratch']
  %s0 = inlined_call_operand.vmem [shape: f32[2,32], index: 0, kind: input, shape index: {}]
  %s1 = inlined_call_operand.vmem [shape: f32[32,512], index: 1, kind: input, shape index: {}]
  %s2 = inlined_call_operand.vmem [shape: f32[1,512], index: 2, kind: input, shape index: {}]
  %s3 = inlined_call_operand.vmem [shape: f32[2,512], index: 3, kind: output, shape index: {}]
  %s4 = sld [smem:[#allocation0]]
  $region22: #{spectrum_embedding_hsqc.1} parent=0
    _
  %s6 = ssub.s32 1, %s4
  %s7 = scalar_select 0, %s6, %s4
  // Predicated region
  $region2: #{spectrum_embedding_hsqc.1} parent=0 // pred_check
    _
  $region3: #{spectrum_embedding_hsqc.1} parent=0 // pred_check_branch
    %9 = sbr.rel (0) target = $region5
  $region4: #{spectrum_embedding_hsqc.1} parent=0 // pred_region
    _
  $region5: #{spectrum_embedding_hsqc.1} parent=0 // pred_fallthru
    _
  // Predicated region
  $region6: #{spectrum_embedding_hsqc.1} parent=0 // pred_check
    _
  $region7: #{spectrum_embedding_hsqc.1} parent=0 // pred_check_branch
    %11 = sbr.rel (0) target = $region9
  $region8: #{spectrum_embedding_hsqc.1} parent=0 // pred_region
    _
  $region9: #{spectrum_embedding_hsqc.1} parent=0 // pred_fallthru
    _
  // Predicated region
  $region10: #{spectrum_embedding_hsqc.1} parent=0 // pred_check
    _
  $region11: #{spectrum_embedding_hsqc.1} parent=0 // pred_check_branch
    %13 = sbr.rel (0) target = $region13
  $region12: #{spectrum_embedding_hsqc.1} parent=0 // pred_region
    _
  $region13: #{spectrum_embedding_hsqc.1} parent=0 // pred_fallthru
    _
  %v14 = vld [vmem:[%s0] sm:$0x3]
  %v15 = vld [vmem:[%s1] sm:$0xff]
  %v16 = vld [vmem:[%s1 + $0x8] sm:$0xff]
  %v17 = vld [vmem:[%s1 + $0x10] sm:$0xff]
  %v18 = vld [vmem:[%s1 + $0x18] sm:$0xff]
  %v19 = vld [vmem:[%s1 + $0x20] sm:$0xff]
  %v20 = vld [vmem:[%s1 + $0x28] sm:$0xff]
  %v21 = vld [vmem:[%s1 + $0x30] sm:$0xff]
  %v22 = vld [vmem:[%s1 + $0x38] sm:$0xff]
  %v23 = vld [vmem:[%s1 + $0x40] sm:$0xff]
  %v24 = vld [vmem:[%s1 + $0x48] sm:$0xff]
  %v25 = vld [vmem:[%s1 + $0x50] sm:$0xff]
  %v26 = vld [vmem:[%s1 + $0x58] sm:$0xff]
  %v27 = vld [vmem:[%s1 + $0x60] sm:$0xff]
  %v28 = vld [vmem:[%s1 + $0x68] sm:$0xff]
  %v29 = vld [vmem:[%s1 + $0x70] sm:$0xff]
  %v30 = vld [vmem:[%s1 + $0x78] sm:$0xff]
  %v31 = vld [vmem:[%s2] sm:$0xf]
  %v33 = vlaneseq
  %v34 = vshrl.u32 %v33, 7
  %v35 = vsub.s32 0, %v34
  %v36 = vrot.slane %v31, %v35
  %v37 = vlaneseq
  %v38 = vshrl.u32 %v37, 7
  %v39 = vsub.s32 1, %v38
  %v40 = vrot.slane %v31, %v39
  %v41 = vlaneseq
  %v42 = vshrl.u32 %v41, 7
  %v43 = vsub.s32 2, %v42
  %v44 = vrot.slane %v31, %v43
  %v45 = vlaneseq
  %v46 = vshrl.u32 %v45, 7
  %v47 = vsub.s32 3, %v46
  %v48 = vrot.slane %v31, %v47
  %vm53 = vcmask 261120
  %v55 = vsel %vm53, %v14, 0
  %57 = vmatprep.subr.mxu0 %v16
  %58 = vmatpush1.msra.mxu0 %v15
  %59 = vmatprep.subr.mxu0 %v20
  %60 = vmatpush1.msra.mxu0 %v19
  %61 = vmatprep.subr.mxu0 %v24
  %62 = vmatpush1.msra.mxu0 %v23
  %63 = vmatprep.subr.mxu0 %v28
  %64 = vmatpush1.msra.mxu0 %v27
  %65 = vmatprep.subr.mxu0 0.0
  %66 = vmatpush1.msra.mxu0 0.0
  %67 = vmatprep.subr.mxu0 0.0
  %68 = vmatpush1.msra.mxu0 0.0
  %69 = vmatprep.subr.mxu0 0.0
  %70 = vmatpush1.msra.mxu0 0.0
  %71 = vmatprep.subr.mxu0 0.0
  %72 = vmatpush1.msra.mxu0 0.0
  %73 = vmatprep.subr.mxu0 0.0
  %74 = vmatpush1.msra.mxu0 0.0
  %75 = vmatprep.subr.mxu0 0.0
  %76 = vmatpush1.msra.mxu0 0.0
  %77 = vmatprep.subr.mxu0 0.0
  %78 = vmatpush1.msra.mxu0 0.0
  %79 = vmatprep.subr.mxu0 0.0
  %80 = vmatpush1.msra.mxu0 0.0
  %81 = vmatprep.subr.mxu0 0.0
  %82 = vmatpush1.msra.mxu0 0.0
  %83 = vmatprep.subr.mxu0 0.0
  %84 = vmatpush1.msra.mxu0 0.0
  %85 = vmatprep.subr.mxu0 0.0
  %86 = vmatpush1.msra.mxu0 0.0
  %87 = vmatprep.subr.mxu0 0.0
  %88 = vmatpush1.msra.mxu0 0.0
  %89 = vmatprep.subr.mxu0 0.0
  %90 = vmatpush1.msra.mxu0 0.0
  %91 = vmatprep.subr.mxu0 0.0
  %92 = vmatpush1.msra.mxu0 0.0
  %93 = vmatprep.subr.mxu0 0.0
  %94 = vmatpush1.msra.mxu0 0.0
  %95 = vmatprep.subr.mxu0 0.0
  %96 = vmatpush1.msra.mxu0 0.0
  %97 = vmatprep.subr.mxu0 0.0
  %98 = vmatpush1.msra.mxu0 0.0
  %99 = vmatprep.subr.mxu0 0.0
  %100 = vmatpush1.msra.mxu0 0.0
  %101 = vmatprep.subr.mxu0 0.0
  %102 = vmatpush1.msra.mxu0 0.0
  %103 = vmatprep.subr.mxu0 0.0
  %104 = vmatpush1.msra.mxu0 0.0
  %105 = vmatprep.subr.mxu0 0.0
  %106 = vmatpush1.msra.mxu0 0.0
  %107 = vmatprep.subr.mxu0 0.0
  %108 = vmatpush1.msra.mxu0 0.0
  %109 = vmatprep.subr.mxu0 0.0
  %110 = vmatpush1.msra.mxu0 0.0
  %111 = vmatprep.subr.mxu0 0.0
  %112 = vmatpush1.msra.mxu0 0.0
  %113 = vmatprep.subr.mxu0 0.0
  %114 = vmatpush1.msra.mxu0 0.0
  %115 = vmatprep.subr.mxu0 0.0
  %116 = vmatpush1.msra.mxu0 0.0
  %117 = vmatprep.subr.mxu0 0.0
  %118 = vmatpush1.msra.mxu0 0.0
  %119 = vmatprep.subr.mxu0 0.0
  %120 = vmatpush1.msra.mxu0 0.0
  %121 = vmatprep.mubr.f32.mxu0 0.0
  %122 = vmatmul.mubr.f32.gmra.mrb[0].mxu0 %v55
  %v123 = vpop.f32.mrb[0].mxu0
  %v124 = vadd.f32 %v36, %v123
  %v125 = vpop.f32.mrb[0].mxu0
  %v126 = vadd.f32 %v40, %v125
  %127 = vdwg.mxu0
  %128 = vmatprep.subr.mxu0 %v18
  %129 = vmatpush1.msra.mxu0 %v17
  %130 = vmatprep.subr.mxu0 %v22
  %131 = vmatpush1.msra.mxu0 %v21
  %132 = vmatprep.subr.mxu0 %v26
  %133 = vmatpush1.msra.mxu0 %v25
  %134 = vmatprep.subr.mxu0 %v30
  %135 = vmatpush1.msra.mxu0 %v29
  %136 = vmatprep.subr.mxu0 0.0
  %137 = vmatpush1.msra.mxu0 0.0
  %138 = vmatprep.subr.mxu0 0.0
  %139 = vmatpush1.msra.mxu0 0.0
  %140 = vmatprep.subr.mxu0 0.0
  %141 = vmatpush1.msra.mxu0 0.0
  %142 = vmatprep.subr.mxu0 0.0
  %143 = vmatpush1.msra.mxu0 0.0
  %144 = vmatprep.subr.mxu0 0.0
  %145 = vmatpush1.msra.mxu0 0.0
  %146 = vmatprep.subr.mxu0 0.0
  %147 = vmatpush1.msra.mxu0 0.0
  %148 = vmatprep.subr.mxu0 0.0
  %149 = vmatpush1.msra.mxu0 0.0
  %150 = vmatprep.subr.mxu0 0.0
  %151 = vmatpush1.msra.mxu0 0.0
  %152 = vmatprep.subr.mxu0 0.0
  %153 = vmatpush1.msra.mxu0 0.0
  %154 = vmatprep.subr.mxu0 0.0
  %155 = vmatpush1.msra.mxu0 0.0
  %156 = vmatprep.subr.mxu0 0.0
  %157 = vmatpush1.msra.mxu0 0.0
  %158 = vmatprep.subr.mxu0 0.0
  %159 = vmatpush1.msra.mxu0 0.0
  %160 = vmatprep.subr.mxu0 0.0
  %161 = vmatpush1.msra.mxu0 0.0
  %162 = vmatprep.subr.mxu0 0.0
  %163 = vmatpush1.msra.mxu0 0.0
  %164 = vmatprep.subr.mxu0 0.0
  %165 = vmatpush1.msra.mxu0 0.0
  %166 = vmatprep.subr.mxu0 0.0
  %167 = vmatpush1.msra.mxu0 0.0
  %168 = vmatprep.subr.mxu0 0.0
  %169 = vmatpush1.msra.mxu0 0.0
  %170 = vmatprep.subr.mxu0 0.0
  %171 = vmatpush1.msra.mxu0 0.0
  %172 = vmatprep.subr.mxu0 0.0
  %173 = vmatpush1.msra.mxu0 0.0
  %174 = vmatprep.subr.mxu0 0.0
  %175 = vmatpush1.msra.mxu0 0.0
  %176 = vmatprep.subr.mxu0 0.0
  %177 = vmatpush1.msra.mxu0 0.0
  %178 = vmatprep.subr.mxu0 0.0
  %179 = vmatpush1.msra.mxu0 0.0
  %180 = vmatprep.subr.mxu0 0.0
  %181 = vmatpush1.msra.mxu0 0.0
  %182 = vmatprep.subr.mxu0 0.0
  %183 = vmatpush1.msra.mxu0 0.0
  %184 = vmatprep.subr.mxu0 0.0
  %185 = vmatpush1.msra.mxu0 0.0
  %186 = vmatprep.subr.mxu0 0.0
  %187 = vmatpush1.msra.mxu0 0.0
  %188 = vmatprep.subr.mxu0 0.0
  %189 = vmatpush1.msra.mxu0 0.0
  %190 = vmatprep.subr.mxu0 0.0
  %191 = vmatpush1.msra.mxu0 0.0
  %192 = vmatprep.mubr.f32.mxu0 0.0
  %193 = vmatmul.mubr.f32.gmra.mrb[0].mxu0 %v55
  %v194 = vpop.f32.mrb[0].mxu0
  %v195 = vadd.f32 %v44, %v194
  %v196 = vpop.f32.mrb[0].mxu0
  %v197 = vadd.f32 %v48, %v196
  %198 = vdwg.mxu0
  %v199 = vmax.f32 %v124, 0.0
  %v200 = vmax.f32 %v126, 0.0
  %v201 = vmax.f32 %v195, 0.0
  %v202 = vmax.f32 %v197, 0.0
  %v207 = vcombine.low %v199, %v200
  %v208 = vcombine.low %v201, %v202
  %v210 = vunpack.c.l.s4 1983009808
  %v211 = vunpack.c.0.s8 %v210
  %v212 = vlaneseq
  %v213 = vshrl.u32 %v212, 7
  %v214 = vsub.s32 %v211, %v213
  %v215 = vrot.slane %v207, %v214
  %v217 = vunpack.c.l.s4 1983009808
  %v218 = vunpack.c.0.s8 %v217
  %v219 = vlaneseq
  %v220 = vshrl.u32 %v219, 7
  %v221 = vsub.s32 %v218, %v220
  %v222 = vrot.slane %v208, %v221
  %v223 = vcombine.low %v215, %v222
  %225 = vst [vmem:[%s3] sm:$0xff] %v223
  // Predicated region
  $region14: #{spectrum_embedding_hsqc.1} parent=0 // pred_check
    _
  $region15: #{spectrum_embedding_hsqc.1} parent=0 // pred_check_branch
    %227 = sbr.rel (0) target = $region17
  $region16: #{spectrum_embedding_hsqc.1} parent=0 // pred_region
    _
  $region17: #{spectrum_embedding_hsqc.1} parent=0 // pred_fallthru
    _
  // Predicated region
  $region18: #{spectrum_embedding_hsqc.1} parent=0 // pred_check
    _
  $region19: #{spectrum_embedding_hsqc.1} parent=0 // pred_check_branch
    %229 = sbr.rel (0) target = $region21
  $region20: #{spectrum_embedding_hsqc.1} parent=0 // pred_region
    _
  $region21: #{spectrum_embedding_hsqc.1} parent=0 // pred_fallthru
    _

</llo_original>
